<compile_context>
chip_gen: v5e
topology: v5e:2x2
jax: 0.10.0
libtpu: 0.0.40
codegen_flags: <defaults>
</compile_context>

<pallas_src>
import functools

import jax
import jax.numpy as jnp
from jax.experimental import pallas as pl
from jax.experimental.pallas import tpu as pltpu

LANE = 128   # pad channel dims to lane width so intermediates stay lane-dense
SUBLANE = 8  # pad row counts to the sublane granule


# ----------------------------- Pallas kernel --------------------------------

def _fused_forward_kernel(*refs, num_gc, num_mlp):
    """Entire forward fused in one kernel invocation.

    refs layout (inputs then output):
      x (N_pad, LANE), a (N_pad, N_pad), s (G_pad, N_pad),
      num_gc  * (w_cat (2*LANE, LANE), b (1, LANE)),
      num_mlp * (w (LANE, LANE),       b (1, LANE)),
      out (G_pad, LANE)
    """
    x_ref, a_ref, s_ref = refs[0], refs[1], refs[2]
    idx = 3
    gc_params = []
    for _ in range(num_gc):
        gc_params.append((refs[idx], refs[idx + 1]))
        idx += 2
    mlp_params = []
    for _ in range(num_mlp):
        mlp_params.append((refs[idx], refs[idx + 1]))
        idx += 2
    o_ref = refs[idx]

    a = a_ref[...]
    y = x_ref[...]                                   # (N_pad, LANE), zero outside valid lanes

    # GraphConv stack: one weight-side MXU matmul per layer.
    #   y <- [y | A @ y] @ [W_root ; W_rel] + b_rel
    for w_ref, b_ref in gc_params:
        agg = jnp.dot(a, y, preferred_element_type=jnp.float32)       # (N_pad, LANE)
        xa = jnp.concatenate([y, agg], axis=-1)                       # (N_pad, 2*LANE), tile-aligned
        y = jnp.dot(xa, w_ref[...], preferred_element_type=jnp.float32) + b_ref[...]

    # MLP readout: Linear + ReLU, no activation on the last layer.
    for i, (w_ref, b_ref) in enumerate(mlp_params):
        y = jnp.dot(y, w_ref[...], preferred_element_type=jnp.float32) + b_ref[...]
        if i < num_mlp - 1:
            y = jnp.maximum(y, 0.0)

    # scatter(..., reduce='mean') as a normalized one-hot matmul.  Write the full
    # lane-dense (G_pad, LANE) slab (unmasked vst); the wrapper slices [G, out_dim].
    o_ref[...] = jnp.dot(s_ref[...], y, preferred_element_type=jnp.float32)


# ------------------------------- wrapper -------------------------------------

def _round_up(v, m):
    return ((v + m - 1) // m) * m


def _pad2d(m, rows, cols):
    return jnp.pad(m, ((0, rows - m.shape[0]), (0, cols - m.shape[1])))


def petri_graph_conv_forward(params, x, edge_index, edge_attr, batch, num_graphs):
    n = x.shape[0]
    out_dim = params["mlp"][-1]["w"].shape[1]
    assert x.shape[1] <= LANE and all(
        p["w_root"].shape[1] <= LANE for p in params["graph_conv"]
    ), "channel dims must fit one lane tile"  # TODO(synk): tile channels for > 128

    n_pad = _round_up(n, SUBLANE)
    g_pad = _round_up(num_graphs, SUBLANE)

    # JAX glue: densify edge list into weighted adjacency A[i, j] = sum_{e: j->i} w_e.
    src, dst = edge_index[0], edge_index[1]
    a = jnp.zeros((n_pad, n_pad), jnp.float32).at[dst, src].add(edge_attr)

    # JAX glue: normalized one-hot scatter-mean matrix S[g, i] = 1[batch[i]==g]/count_g.
    onehot = (batch[None, :] == jnp.arange(num_graphs)[:, None]).astype(jnp.float32)
    counts = jnp.maximum(onehot.sum(axis=1, keepdims=True), 1.0)
    s = _pad2d(onehot / counts, g_pad, n_pad)

    # Pad channels to lane width; merge W_root / W_rel into one K-stacked weight.
    inputs = [_pad2d(x, n_pad, LANE), a, s]
    for p in params["graph_conv"]:
        w_root_p = _pad2d(p["w_root"], LANE, LANE)
        w_rel_p = _pad2d(p["w_rel"], LANE, LANE)
        inputs += [jnp.concatenate([w_root_p, w_rel_p], axis=0),     # (2*LANE, LANE)
                   _pad2d(p["b_rel"], 1, LANE)]
    for p in params["mlp"]:
        inputs += [_pad2d(p["w"], LANE, LANE), _pad2d(p["b"], 1, LANE)]

    kernel = functools.partial(
        _fused_forward_kernel,
        num_gc=len(params["graph_conv"]),
        num_mlp=len(params["mlp"]),
    )
    vmem = pl.BlockSpec(memory_space=pltpu.MemorySpace.VMEM)
    pooled = pl.pallas_call(
        kernel,
        out_shape=jax.ShapeDtypeStruct((g_pad, LANE), jnp.float32),
        in_specs=[vmem] * len(inputs),
        out_specs=vmem,
    )(*inputs)
    return pooled[:num_graphs, :out_dim]


# ------------------------ parameter / model setup -----------------------------

def init_params(key, in_channels, hidden_channels, num_layers, readout_layers):
    """Deterministic synthetic parameters (shapes match the PyTorch module)."""
    params = {"graph_conv": [], "mlp": []}
    dims = [in_channels] + [hidden_channels] * (num_layers + 1)
    for l in range(num_layers + 1):
        key, k1, k2, k3 = jax.random.split(key, 4)
        c_in, c_out = dims[l], dims[l + 1]
        params["graph_conv"].append(dict(
            w_rel=jax.random.normal(k1, (c_in, c_out), jnp.float32) * 0.1,
            b_rel=jax.random.normal(k2, (1, c_out), jnp.float32) * 0.1,
            w_root=jax.random.normal(k3, (c_in, c_out), jnp.float32) * 0.1,
        ))
    # MLPReadout: layer_sizes = [hidden // 2**l for l in range(L)] + [1]
    sizes = [hidden_channels // (2 ** l) for l in range(readout_layers)] + [1]
    for l in range(len(sizes) - 1):
        key, k1, k2 = jax.random.split(key, 3)
        params["mlp"].append(dict(
            w=jax.random.normal(k1, (sizes[l], sizes[l + 1]), jnp.float32) * 0.1,
            b=jax.random.normal(k2, (1, sizes[l + 1]), jnp.float32) * 0.1,
        ))
    return params


def reference_forward(params, x, edge_index, edge_attr, batch, num_graphs):
    """Pure-JAX reference for correctness checking."""
    n = x.shape[0]
    src, dst = edge_index[0], edge_index[1]
    a = jnp.zeros((n, n), jnp.float32).at[dst, src].add(edge_attr)
    y = x
    for p in params["graph_conv"]:
        y = (a @ y) @ p["w_rel"] + p["b_rel"] + y @ p["w_root"]
    n_mlp = len(params["mlp"])
    for i, p in enumerate(params["mlp"]):
        y = y @ p["w"] + p["b"]
        if i < n_mlp - 1:
            y = jnp.maximum(y, 0.0)
    onehot = (batch[None, :] == jnp.arange(num_graphs)[:, None]).astype(jnp.float32)
    counts = jnp.maximum(onehot.sum(axis=1, keepdims=True), 1.0)
    return (onehot / counts) @ y


# ----------------------------------- main -------------------------------------

if __name__ == "__main__":
    in_channels = 4
    hidden_channels = 32
    num_layers = 2          # total GraphConv layers = num_layers + 1 = 3
    readout_layers = 2      # MLP sizes: [32, 16, 1]

    num_nodes = 16
    num_edges = 48
    num_graphs = 2

    key = jax.random.PRNGKey(0)
    key, kx, ks, kd, kw, kp = jax.random.split(key, 6)

    x = jax.random.normal(kx, (num_nodes, in_channels), jnp.float32)
    src = jax.random.randint(ks, (num_edges,), 0, num_nodes)
    dst = jax.random.randint(kd, (num_edges,), 0, num_nodes)
    edge_index = jnp.stack([src, dst], axis=0)                           # [2, E]
    edge_attr = jax.random.uniform(kw, (num_edges,), jnp.float32)        # [E] edge weights
    batch = jnp.repeat(jnp.arange(num_graphs), num_nodes // num_graphs)  # [N]

    params = init_params(kp, in_channels, hidden_channels, num_layers, readout_layers)

    out = petri_graph_conv_forward(params, x, edge_index, edge_attr, batch, num_graphs)
    out = jax.block_until_ready(out)

    ref = reference_forward(params, x, edge_index, edge_attr, batch, num_graphs)
    assert out.shape == (num_graphs, 1)
    assert jnp.allclose(out, ref, atol=1e-4, rtol=1e-4), (out, ref)

    print("KERNEL_OK")
</pallas_src>

<mosaic_0001>
module attributes {stable_mosaic.version = 11 : i64} {
  func.func @_fused_forward_kernel(%arg0: memref<16x128xf32, #tpu.memory_space<vmem>>, %arg1: memref<16x16xf32, #tpu.memory_space<vmem>>, %arg2: memref<8x16xf32, #tpu.memory_space<vmem>>, %arg3: memref<256x128xf32, #tpu.memory_space<vmem>>, %arg4: memref<1x128xf32, #tpu.memory_space<vmem>>, %arg5: memref<256x128xf32, #tpu.memory_space<vmem>>, %arg6: memref<1x128xf32, #tpu.memory_space<vmem>>, %arg7: memref<256x128xf32, #tpu.memory_space<vmem>>, %arg8: memref<1x128xf32, #tpu.memory_space<vmem>>, %arg9: memref<128x128xf32, #tpu.memory_space<vmem>>, %arg10: memref<1x128xf32, #tpu.memory_space<vmem>>, %arg11: memref<128x128xf32, #tpu.memory_space<vmem>>, %arg12: memref<1x128xf32, #tpu.memory_space<vmem>>, %arg13: memref<8x128xf32, #tpu.memory_space<vmem>>) attributes {dimension_semantics = [], scalar_prefetch = 0 : i64, scratch_operands = 0 : i64, tpu.core_type = #tpu.core_type<tc>} {
    %c0 = arith.constant 0 : index
    %c0_0 = arith.constant 0 : index
    %0 = vector.load %arg1[%c0, %c0_0] : memref<16x16xf32, #tpu.memory_space<vmem>>, vector<16x16xf32>
    %c0_1 = arith.constant 0 : index
    %c0_2 = arith.constant 0 : index
    %1 = vector.load %arg0[%c0_1, %c0_2] : memref<16x128xf32, #tpu.memory_space<vmem>>, vector<16x128xf32>
    %cst = arith.constant dense<0.000000e+00> : vector<16x128xf32>
    %2 = tpu.matmul %0, %1, %cst {dimension_numbers = #tpu.dot_dimension_numbers<[1], [0], [0], [1], [0, 0, 1, 1], [], []>} : vector<16x16xf32>, vector<16x128xf32>, vector<16x128xf32> -> vector<16x128xf32>
    %3 = tpu.concatenate %1, %2 in 1 : vector<16x128xf32>, vector<16x128xf32> -> vector<16x256xf32>
    %c0_3 = arith.constant 0 : index
    %c0_4 = arith.constant 0 : index
    %4 = vector.load %arg3[%c0_3, %c0_4] : memref<256x128xf32, #tpu.memory_space<vmem>>, vector<256x128xf32>
    %cst_5 = arith.constant dense<0.000000e+00> : vector<16x128xf32>
    %5 = tpu.matmul %3, %4, %cst_5 {dimension_numbers = #tpu.dot_dimension_numbers<[1], [0], [0], [1], [0, 0, 1, 1], [], []>} : vector<16x256xf32>, vector<256x128xf32>, vector<16x128xf32> -> vector<16x128xf32>
    %c0_6 = arith.constant 0 : index
    %c0_7 = arith.constant 0 : index
    %6 = vector.load %arg4[%c0_6, %c0_7] : memref<1x128xf32, #tpu.memory_space<vmem>>, vector<1x128xf32>
    %7 = vector.broadcast %6 : vector<1x128xf32> to vector<16x128xf32>
    %8 = arith.addf %5, %7 : vector<16x128xf32>
    %cst_8 = arith.constant dense<0.000000e+00> : vector<16x128xf32>
    %9 = tpu.matmul %0, %8, %cst_8 {dimension_numbers = #tpu.dot_dimension_numbers<[1], [0], [0], [1], [0, 0, 1, 1], [], []>} : vector<16x16xf32>, vector<16x128xf32>, vector<16x128xf32> -> vector<16x128xf32>
    %10 = tpu.concatenate %8, %9 in 1 : vector<16x128xf32>, vector<16x128xf32> -> vector<16x256xf32>
    %c0_9 = arith.constant 0 : index
    %c0_10 = arith.constant 0 : index
    %11 = vector.load %arg5[%c0_9, %c0_10] : memref<256x128xf32, #tpu.memory_space<vmem>>, vector<256x128xf32>
    %cst_11 = arith.constant dense<0.000000e+00> : vector<16x128xf32>
    %12 = tpu.matmul %10, %11, %cst_11 {dimension_numbers = #tpu.dot_dimension_numbers<[1], [0], [0], [1], [0, 0, 1, 1], [], []>} : vector<16x256xf32>, vector<256x128xf32>, vector<16x128xf32> -> vector<16x128xf32>
    %c0_12 = arith.constant 0 : index
    %c0_13 = arith.constant 0 : index
    %13 = vector.load %arg6[%c0_12, %c0_13] : memref<1x128xf32, #tpu.memory_space<vmem>>, vector<1x128xf32>
    %14 = vector.broadcast %13 : vector<1x128xf32> to vector<16x128xf32>
    %15 = arith.addf %12, %14 : vector<16x128xf32>
    %cst_14 = arith.constant dense<0.000000e+00> : vector<16x128xf32>
    %16 = tpu.matmul %0, %15, %cst_14 {dimension_numbers = #tpu.dot_dimension_numbers<[1], [0], [0], [1], [0, 0, 1, 1], [], []>} : vector<16x16xf32>, vector<16x128xf32>, vector<16x128xf32> -> vector<16x128xf32>
    %17 = tpu.concatenate %15, %16 in 1 : vector<16x128xf32>, vector<16x128xf32> -> vector<16x256xf32>
    %c0_15 = arith.constant 0 : index
    %c0_16 = arith.constant 0 : index
    %18 = vector.load %arg7[%c0_15, %c0_16] : memref<256x128xf32, #tpu.memory_space<vmem>>, vector<256x128xf32>
    %cst_17 = arith.constant dense<0.000000e+00> : vector<16x128xf32>
    %19 = tpu.matmul %17, %18, %cst_17 {dimension_numbers = #tpu.dot_dimension_numbers<[1], [0], [0], [1], [0, 0, 1, 1], [], []>} : vector<16x256xf32>, vector<256x128xf32>, vector<16x128xf32> -> vector<16x128xf32>
    %c0_18 = arith.constant 0 : index
    %c0_19 = arith.constant 0 : index
    %20 = vector.load %arg8[%c0_18, %c0_19] : memref<1x128xf32, #tpu.memory_space<vmem>>, vector<1x128xf32>
    %21 = vector.broadcast %20 : vector<1x128xf32> to vector<16x128xf32>
    %22 = arith.addf %19, %21 : vector<16x128xf32>
    %c0_20 = arith.constant 0 : index
    %c0_21 = arith.constant 0 : index
    %23 = vector.load %arg9[%c0_20, %c0_21] : memref<128x128xf32, #tpu.memory_space<vmem>>, vector<128x128xf32>
    %cst_22 = arith.constant dense<0.000000e+00> : vector<16x128xf32>
    %24 = tpu.matmul %22, %23, %cst_22 {dimension_numbers = #tpu.dot_dimension_numbers<[1], [0], [0], [1], [0, 0, 1, 1], [], []>} : vector<16x128xf32>, vector<128x128xf32>, vector<16x128xf32> -> vector<16x128xf32>
    %c0_23 = arith.constant 0 : index
    %c0_24 = arith.constant 0 : index
    %25 = vector.load %arg10[%c0_23, %c0_24] : memref<1x128xf32, #tpu.memory_space<vmem>>, vector<1x128xf32>
    %26 = vector.broadcast %25 : vector<1x128xf32> to vector<16x128xf32>
    %27 = arith.addf %24, %26 : vector<16x128xf32>
    %cst_25 = arith.constant 0.000000e+00 : f32
    %28 = vector.broadcast %cst_25 : f32 to vector<16x128xf32>
    %29 = arith.maximumf %27, %28 : vector<16x128xf32>
    %c0_26 = arith.constant 0 : index
    %c0_27 = arith.constant 0 : index
    %30 = vector.load %arg11[%c0_26, %c0_27] : memref<128x128xf32, #tpu.memory_space<vmem>>, vector<128x128xf32>
    %cst_28 = arith.constant dense<0.000000e+00> : vector<16x128xf32>
    %31 = tpu.matmul %29, %30, %cst_28 {dimension_numbers = #tpu.dot_dimension_numbers<[1], [0], [0], [1], [0, 0, 1, 1], [], []>} : vector<16x128xf32>, vector<128x128xf32>, vector<16x128xf32> -> vector<16x128xf32>
    %c0_29 = arith.constant 0 : index
    %c0_30 = arith.constant 0 : index
    %32 = vector.load %arg12[%c0_29, %c0_30] : memref<1x128xf32, #tpu.memory_space<vmem>>, vector<1x128xf32>
    %33 = vector.broadcast %32 : vector<1x128xf32> to vector<16x128xf32>
    %34 = arith.addf %31, %33 : vector<16x128xf32>
    %c0_31 = arith.constant 0 : index
    %c0_32 = arith.constant 0 : index
    %35 = vector.load %arg2[%c0_31, %c0_32] : memref<8x16xf32, #tpu.memory_space<vmem>>, vector<8x16xf32>
    %cst_33 = arith.constant dense<0.000000e+00> : vector<8x128xf32>
    %36 = tpu.matmul %35, %34, %cst_33 {dimension_numbers = #tpu.dot_dimension_numbers<[1], [0], [0], [1], [0, 0, 1, 1], [], []>} : vector<8x16xf32>, vector<16x128xf32>, vector<8x128xf32> -> vector<8x128xf32>
    %c0_34 = arith.constant 0 : index
    %c0_35 = arith.constant 0 : index
    %37 = vector.load %arg13[%c0_34, %c0_35] : memref<8x128xf32, #tpu.memory_space<vmem>>, vector<8x128xf32>
    tpu.vector_store %arg13[%c0_34, %c0_35], %36 {strides = array<i32>} : memref<8x128xf32, #tpu.memory_space<vmem>>, vector<8x128xf32>,
    return
  }
}

</mosaic_0001>

<llo_original>
// kernel: tpu_custom_call.1
$region0: #{tpu_custom_call.1}
  #allocation0 [shape = 'u32[]', space=smem, size = 0x4, offset = 0x4, fixed_abs, tag = 'smem constant byte address 0x4 - core index']
  #allocation1 [shape = 'u32[72,128]{1,0:T(1,128)}', space=vmem, size = 0x9000, scoped, tag = 'internal scratch']
  %s0 = inlined_call_operand.hbm [shape: f32[16,128], index: 0, kind: input, shape index: {}]
  %s1 = inlined_call_operand.hbm [shape: f32[16,16], index: 1, kind: input, shape index: {}]
  %s2 = inlined_call_operand.hbm [shape: f32[8,16], index: 2, kind: input, shape index: {}]
  %s3 = inlined_call_operand.hbm [shape: f32[256,128], index: 3, kind: input, shape index: {}]
  %s4 = inlined_call_operand.vmem [shape: f32[1,128], index: 4, kind: input, shape index: {}]
  %s5 = inlined_call_operand.hbm [shape: f32[256,128], index: 5, kind: input, shape index: {}]
  %s6 = inlined_call_operand.vmem [shape: f32[1,128], index: 6, kind: input, shape index: {}]
  %s7 = inlined_call_operand.hbm [shape: f32[256,128], index: 7, kind: input, shape index: {}]
  %s8 = inlined_call_operand.vmem [shape: f32[1,128], index: 8, kind: input, shape index: {}]
  %s9 = inlined_call_operand.hbm [shape: f32[128,128], index: 9, kind: input, shape index: {}]
  %s10 = inlined_call_operand.vmem [shape: f32[1,128], index: 10, kind: input, shape index: {}]
  %s11 = inlined_call_operand.hbm [shape: f32[128,128], index: 11, kind: input, shape index: {}]
  %s12 = inlined_call_operand.vmem [shape: f32[1,128], index: 12, kind: input, shape index: {}]
  %s13 = inlined_call_operand.hbm [shape: f32[8,128], index: 13, kind: output, shape index: {}]
  %s14 = sld [smem:[#allocation0]]
  $region94: #{tpu_custom_call.1} parent=0
    _
  %s16 = ssub.s32 1, %s14
  %s17 = scalar_select 0, %s16, %s14
  $region1: #{tpu_custom_call.1} parent=0
    #allocation2 [shape = 'u8[8192]{0}', space=vmem, size = 0x2000, scoped, tag = 'input window, operand 0, single buffered']
    #allocation3 [shape = 's32[1]{0}', space=sflag, size = 0x4, scoped, tag = 'scoped memory for tpu_custom_call.1']
    #allocation4 [shape = 's32[1]{0}', space=sflag, size = 0x4, scoped, tag = 'scoped memory for tpu_custom_call.1']
    #allocation5 [shape = 'u8[8192]{0}', space=vmem, size = 0x2000, scoped, tag = 'input window, operand 1, single buffered']
    #allocation6 [shape = 's32[1]{0}', space=sflag, size = 0x4, scoped, tag = 'scoped memory for tpu_custom_call.1']
    #allocation7 [shape = 'u8[4096]{0}', space=vmem, size = 0x1000, scoped, tag = 'input window, operand 2, single buffered']
    #allocation8 [shape = 'u8[131072]{0}', space=vmem, size = 0x20000, scoped, tag = 'input window, operand 3, single buffered']
    #allocation9 [shape = 's32[1]{0}', space=sflag, size = 0x4, scoped, tag = 'scoped memory for tpu_custom_call.1']
    #allocation10 [shape = 'u8[131072]{0}', space=vmem, size = 0x20000, scoped, tag = 'input window, operand 5, single buffered']
    #allocation11 [shape = 'u8[131072]{0}', space=vmem, size = 0x20000, scoped, tag = 'input window, operand 7, single buffered']
    #allocation12 [shape = 's32[1]{0}', space=sflag, size = 0x4, scoped, tag = 'scoped memory for tpu_custom_call.1']
    #allocation13 [shape = 'u8[65536]{0}', space=vmem, size = 0x10000, scoped, tag = 'input window, operand 9, single buffered']
    #allocation14 [shape = 'u8[65536]{0}', space=vmem, size = 0x10000, scoped, tag = 'input window, operand 11, single buffered']
    #allocation15 [shape = 's32[1]{0}', space=sflag, size = 0x4, scoped, tag = 'scoped memory for tpu_custom_call.1']
    #allocation16 [shape = 'u8[4096]{0}', space=vmem, size = 0x1000, scoped, tag = 'output window, operand 0, single buffered']
    %18 = vsyncpa [#allocation3], 0
    %19 = vsyncpa [#allocation6], 0
    %20 = vsyncpa [#allocation9], 0
    %21 = vsyncpa [#allocation12], 0
    %22 = vsyncpa [#allocation15], 0
    %23 = vsyncpa [#allocation4], 0
    // Predicated region
    $region2: #{tpu_custom_call.1} parent=1 // pred_check
      _
    $region3: #{tpu_custom_call.1} parent=1 // pred_check_branch
      %25 = sbr.rel (0) target = $region5
    $region4: #{tpu_custom_call.1} parent=1 // pred_region
      %27 = vsyncadd [#allocation3], 0
      %s28 = sshll.u32 %s0, 4
      %s29 = int_to_ptr.hbm [resolvable:$true] %s28
      %s30 = sshll.u32 [#allocation2], 4
      %s31 = int_to_ptr.vmem [resolvable:$true] %s30
      %36 = dma.hbm_to_vmem [thread:$0]  %s29, 256, %s31, [#allocation3], 128, 128, 8
    $region5: #{tpu_custom_call.1} parent=1 // pred_fallthru
      _
    // Predicated region
    $region6: #{tpu_custom_call.1} parent=1 // pred_check
      _
    $region7: #{tpu_custom_call.1} parent=1 // pred_check_branch
      %38 = sbr.rel (0) target = $region9
    $region8: #{tpu_custom_call.1} parent=1 // pred_region
      %40 = vsyncadd [#allocation6], 0
      %s41 = sshll.u32 %s1, 4
      %s42 = int_to_ptr.hbm [resolvable:$true] %s41
      %s43 = sshll.u32 [#allocation5], 4
      %s44 = int_to_ptr.vmem [resolvable:$true] %s43
      %49 = dma.hbm_to_vmem [thread:$0]  %s42, 256, %s44, [#allocation6], 128, 128, 8
    $region9: #{tpu_custom_call.1} parent=1 // pred_fallthru
      _
    // Predicated region
    $region10: #{tpu_custom_call.1} parent=1 // pred_check
      _
    $region11: #{tpu_custom_call.1} parent=1 // pred_check_branch
      %51 = sbr.rel (0) target = $region13
    $region12: #{tpu_custom_call.1} parent=1 // pred_region
      %53 = vsyncadd [#allocation6], 0
      %s55 = sshll.u32 %s2, 4
      %s56 = int_to_ptr.hbm [resolvable:$true] %s55
      %s57 = sshll.u32 [#allocation7], 4
      %s58 = int_to_ptr.vmem [resolvable:$true] %s57
      %60 = dma.hbm_to_vmem [thread:$0]  %s56, 128, %s58, [#allocation6]
    $region13: #{tpu_custom_call.1} parent=1 // pred_fallthru
      _
    // Predicated region
    $region14: #{tpu_custom_call.1} parent=1 // pred_check
      _
    $region15: #{tpu_custom_call.1} parent=1 // pred_check_branch
      %62 = sbr.rel (0) target = $region17
    $region16: #{tpu_custom_call.1} parent=1 // pred_region
      %64 = vsyncadd [#allocation9], 0
      %s65 = sshll.u32 %s3, 4
      %s66 = int_to_ptr.hbm [resolvable:$true] %s65
      %s67 = sshll.u32 [#allocation8], 4
      %s68 = int_to_ptr.vmem [resolvable:$true] %s67
      %73 = dma.hbm_to_vmem [thread:$0]  %s66, 4096, %s68, [#allocation9], 128, 128, 8
    $region17: #{tpu_custom_call.1} parent=1 // pred_fallthru
      _
    // Predicated region
    $region18: #{tpu_custom_call.1} parent=1 // pred_check
      _
    $region19: #{tpu_custom_call.1} parent=1 // pred_check_branch
      %75 = sbr.rel (0) target = $region21
    $region20: #{tpu_custom_call.1} parent=1 // pred_region
      _
    $region21: #{tpu_custom_call.1} parent=1 // pred_fallthru
      _
    // Predicated region
    $region22: #{tpu_custom_call.1} parent=1 // pred_check
      _
    $region23: #{tpu_custom_call.1} parent=1 // pred_check_branch
      %77 = sbr.rel (0) target = $region25
    $region24: #{tpu_custom_call.1} parent=1 // pred_region
      %79 = vsyncadd [#allocation9], 0
      %s80 = sshll.u32 %s5, 4
      %s81 = int_to_ptr.hbm [resolvable:$true] %s80
      %s82 = sshll.u32 [#allocation10], 4
      %s83 = int_to_ptr.vmem [resolvable:$true] %s82
      %88 = dma.hbm_to_vmem [thread:$0]  %s81, 4096, %s83, [#allocation9], 128, 128, 8
    $region25: #{tpu_custom_call.1} parent=1 // pred_fallthru
      _
    // Predicated region
    $region26: #{tpu_custom_call.1} parent=1 // pred_check
      _
    $region27: #{tpu_custom_call.1} parent=1 // pred_check_branch
      %90 = sbr.rel (0) target = $region29
    $region28: #{tpu_custom_call.1} parent=1 // pred_region
      _
    $region29: #{tpu_custom_call.1} parent=1 // pred_fallthru
      _
    // Predicated region
    $region30: #{tpu_custom_call.1} parent=1 // pred_check
      _
    $region31: #{tpu_custom_call.1} parent=1 // pred_check_branch
      %92 = sbr.rel (0) target = $region33
    $region32: #{tpu_custom_call.1} parent=1 // pred_region
      %94 = vsyncadd [#allocation12], 0
      %s95 = sshll.u32 %s7, 4
      %s96 = int_to_ptr.hbm [resolvable:$true] %s95
      %s97 = sshll.u32 [#allocation11], 4
      %s98 = int_to_ptr.vmem [resolvable:$true] %s97
      %103 = dma.hbm_to_vmem [thread:$0]  %s96, 4096, %s98, [#allocation12], 128, 128, 8
    $region33: #{tpu_custom_call.1} parent=1 // pred_fallthru
      _
    // Predicated region
    $region34: #{tpu_custom_call.1} parent=1 // pred_check
      _
    $region35: #{tpu_custom_call.1} parent=1 // pred_check_branch
      %105 = sbr.rel (0) target = $region37
    $region36: #{tpu_custom_call.1} parent=1 // pred_region
      _
    $region37: #{tpu_custom_call.1} parent=1 // pred_fallthru
      _
    // Predicated region
    $region38: #{tpu_custom_call.1} parent=1 // pred_check
      _
    $region39: #{tpu_custom_call.1} parent=1 // pred_check_branch
      %107 = sbr.rel (0) target = $region41
    $region40: #{tpu_custom_call.1} parent=1 // pred_region
      %109 = vsyncadd [#allocation12], 0
      %s110 = sshll.u32 %s9, 4
      %s111 = int_to_ptr.hbm [resolvable:$true] %s110
      %s112 = sshll.u32 [#allocation13], 4
      %s113 = int_to_ptr.vmem [resolvable:$true] %s112
      %118 = dma.hbm_to_vmem [thread:$0]  %s111, 2048, %s113, [#allocation12], 128, 128, 8
    $region41: #{tpu_custom_call.1} parent=1 // pred_fallthru
      _
    // Predicated region
    $region42: #{tpu_custom_call.1} parent=1 // pred_check
      _
    $region43: #{tpu_custom_call.1} parent=1 // pred_check_branch
      %120 = sbr.rel (0) target = $region45
    $region44: #{tpu_custom_call.1} parent=1 // pred_region
      _
    $region45: #{tpu_custom_call.1} parent=1 // pred_fallthru
      _
    // Predicated region
    $region46: #{tpu_custom_call.1} parent=1 // pred_check
      _
    $region47: #{tpu_custom_call.1} parent=1 // pred_check_branch
      %122 = sbr.rel (0) target = $region49
    $region48: #{tpu_custom_call.1} parent=1 // pred_region
      %124 = vsyncadd [#allocation15], 0
      %s125 = sshll.u32 %s11, 4
      %s126 = int_to_ptr.hbm [resolvable:$true] %s125
      %s127 = sshll.u32 [#allocation14], 4
      %s128 = int_to_ptr.vmem [resolvable:$true] %s127
      %133 = dma.hbm_to_vmem [thread:$0]  %s126, 2048, %s128, [#allocation15], 128, 128, 8
    $region49: #{tpu_custom_call.1} parent=1 // pred_fallthru
      _
    // Predicated region
    $region50: #{tpu_custom_call.1} parent=1 // pred_check
      _
    $region51: #{tpu_custom_call.1} parent=1 // pred_check_branch
      %135 = sbr.rel (0) target = $region53
    $region52: #{tpu_custom_call.1} parent=1 // pred_region
      _
    $region53: #{tpu_custom_call.1} parent=1 // pred_fallthru
      _
    // Predicated region
    $region54: #{tpu_custom_call.1} parent=1 // pred_check
      _
    $region55: #{tpu_custom_call.1} parent=1 // pred_check_branch
      %137 = sbr.rel (0) target = $region57
    $region56: #{tpu_custom_call.1} parent=1 // pred_region
      %139 = dma.done [#allocation3], 256
    $region57: #{tpu_custom_call.1} parent=1 // pred_fallthru
      _
    // Predicated region
    $region58: #{tpu_custom_call.1} parent=1 // pred_check
      _
    $region59: #{tpu_custom_call.1} parent=1 // pred_check_branch
      %141 = sbr.rel (0) target = $region61
    $region60: #{tpu_custom_call.1} parent=1 // pred_region
      %143 = dma.done [#allocation6], 256
    $region61: #{tpu_custom_call.1} parent=1 // pred_fallthru
      _
    // Predicated region
    $region62: #{tpu_custom_call.1} parent=1 // pred_check
      _
    $region63: #{tpu_custom_call.1} parent=1 // pred_check_branch
      %145 = sbr.rel (0) target = $region65
    $region64: #{tpu_custom_call.1} parent=1 // pred_region
      %147 = dma.done [#allocation6], 128
    $region65: #{tpu_custom_call.1} parent=1 // pred_fallthru
      _
    // Predicated region
    $region66: #{tpu_custom_call.1} parent=1 // pred_check
      _
    $region67: #{tpu_custom_call.1} parent=1 // pred_check_branch
      %149 = sbr.rel (0) target = $region69
    $region68: #{tpu_custom_call.1} parent=1 // pred_region
      %151 = dma.done [#allocation9], 4096
    $region69: #{tpu_custom_call.1} parent=1 // pred_fallthru
      _
    // Predicated region
    $region70: #{tpu_custom_call.1} parent=1 // pred_check
      _
    $region71: #{tpu_custom_call.1} parent=1 // pred_check_branch
      %153 = sbr.rel (0) target = $region73
    $region72: #{tpu_custom_call.1} parent=1 // pred_region
      %155 = dma.done [#allocation9], 4096
    $region73: #{tpu_custom_call.1} parent=1 // pred_fallthru
      _
    // Predicated region
    $region74: #{tpu_custom_call.1} parent=1 // pred_check
      _
    $region75: #{tpu_custom_call.1} parent=1 // pred_check_branch
      %157 = sbr.rel (0) target = $region77
    $region76: #{tpu_custom_call.1} parent=1 // pred_region
      %159 = dma.done [#allocation12], 4096
    $region77: #{tpu_custom_call.1} parent=1 // pred_fallthru
      _
    // Predicated region
    $region78: #{tpu_custom_call.1} parent=1 // pred_check
      _
    $region79: #{tpu_custom_call.1} parent=1 // pred_check_branch
      %161 = sbr.rel (0) target = $region81
    $region80: #{tpu_custom_call.1} parent=1 // pred_region
      %163 = dma.done [#allocation12], 2048
    $region81: #{tpu_custom_call.1} parent=1 // pred_fallthru
      _
    // Predicated region
    $region82: #{tpu_custom_call.1} parent=1 // pred_check
      _
    $region83: #{tpu_custom_call.1} parent=1 // pred_check_branch
      %165 = sbr.rel (0) target = $region85
    $region84: #{tpu_custom_call.1} parent=1 // pred_region
      %167 = dma.done [#allocation15], 2048
    $region85: #{tpu_custom_call.1} parent=1 // pred_fallthru
      _
    %v168 = vld [vmem:[#allocation5] sm:$0xff]
    %v169 = vld [vmem:[#allocation5 + $0x8] sm:$0xff]
    %v170 = vld [vmem:[#allocation2] sm:$0xff]
    %v171 = vld [vmem:[#allocation2 + $0x8] sm:$0xff]
    %vm172 = vcmask 130048
    %v174 = vsel %vm172, %v168, 0
    %v177 = vsel %vm172, %v169, 0
    %179 = vmatpush.msra.mxu0 0.0
    %180 = vmatpush.msra.mxu0 0.0
    %181 = vmatpush.msra.mxu0 0.0
    %182 = vmatpush.msra.mxu0 0.0
    %183 = vmatpush.msra.mxu0 0.0
    %184 = vmatpush.msra.mxu0 0.0
    %185 = vmatpush.msra.mxu0 0.0
    %186 = vmatpush.msra.mxu0 0.0
    %187 = vmatpush.msra.mxu0 0.0
    %188 = vmatpush.msra.mxu0 0.0
    %189 = vmatpush.msra.mxu0 0.0
    %190 = vmatpush.msra.mxu0 0.0
    %191 = vmatpush.msra.mxu0 0.0
    %192 = vmatpush.msra.mxu0 0.0
    %193 = vmatpush.msra.mxu0 %v171
    %194 = vmatpush.msra.mxu0 %v170
    %195 = vmatmul.f32.gmra.mxu0 %v174
    %v196 = vpop.f32.mrf.mxu0
    %v197 = vadd.f32 0.0, %v196
    %198 = vmatmul.f32.gmra.mxu0 %v177
    %v199 = vpop.f32.mrf.mxu0
    %v200 = vadd.f32 0.0, %v199
    %201 = vdwg.mxu0
    %v202 = vld [vmem:[#allocation8] sm:$0xff]
    %v203 = vld [vmem:[#allocation8 + $0x8] sm:$0xff]
    %v204 = vld [vmem:[#allocation8 + $0x10] sm:$0xff]
    %v205 = vld [vmem:[#allocation8 + $0x18] sm:$0xff]
    %v206 = vld [vmem:[#allocation8 + $0x20] sm:$0xff]
    %v207 = vld [vmem:[#allocation8 + $0x28] sm:$0xff]
    %v208 = vld [vmem:[#allocation8 + $0x30] sm:$0xff]
    %v209 = vld [vmem:[#allocation8 + $0x38] sm:$0xff]
    %v210 = vld [vmem:[#allocation8 + $0x40] sm:$0xff]
    %v211 = vld [vmem:[#allocation8 + $0x48] sm:$0xff]
    %v212 = vld [vmem:[#allocation8 + $0x50] sm:$0xff]
    %v213 = vld [vmem:[#allocation8 + $0x58] sm:$0xff]
    %v214 = vld [vmem:[#allocation8 + $0x60] sm:$0xff]
    %v215 = vld [vmem:[#allocation8 + $0x68] sm:$0xff]
    %v216 = vld [vmem:[#allocation8 + $0x70] sm:$0xff]
    %v217 = vld [vmem:[#allocation8 + $0x78] sm:$0xff]
    %v218 = vld [vmem:[#allocation8 + $0x80] sm:$0xff]
    %v219 = vld [vmem:[#allocation8 + $0x88] sm:$0xff]
    %v220 = vld [vmem:[#allocation8 + $0x90] sm:$0xff]
    %v221 = vld [vmem:[#allocation8 + $0x98] sm:$0xff]
    %v222 = vld [vmem:[#allocation8 + $0xa0] sm:$0xff]
    %v223 = vld [vmem:[#allocation8 + $0xa8] sm:$0xff]
    %v224 = vld [vmem:[#allocation8 + $0xb0] sm:$0xff]
    %v225 = vld [vmem:[#allocation8 + $0xb8] sm:$0xff]
    %v226 = vld [vmem:[#allocation8 + $0xc0] sm:$0xff]
    %v227 = vld [vmem:[#allocation8 + $0xc8] sm:$0xff]
    %v228 = vld [vmem:[#allocation8 + $0xd0] sm:$0xff]
    %v229 = vld [vmem:[#allocation8 + $0xd8] sm:$0xff]
    %v230 = vld [vmem:[#allocation8 + $0xe0] sm:$0xff]
    %v231 = vld [vmem:[#allocation8 + $0xe8] sm:$0xff]
    %v232 = vld [vmem:[#allocation8 + $0xf0] sm:$0xff]
    %v233 = vld [vmem:[#allocation8 + $0xf8] sm:$0xff]
    %v234 = vld [vmem:[%s4] sm:$0x1]
    %v236 = vperm.slane %v234, 0
    %238 = vmatpush.msra.mxu0 %v217
    %239 = vmatpush.msra.mxu0 %v216
    %240 = vmatpush.msra.mxu0 %v215
    %241 = vmatpush.msra.mxu0 %v214
    %242 = vmatpush.msra.mxu0 %v213
    %243 = vmatpush.msra.mxu0 %v212
    %244 = vmatpush.msra.mxu0 %v211
    %245 = vmatpush.msra.mxu0 %v210
    %246 = vmatpush.msra.mxu0 %v209
    %247 = vmatpush.msra.mxu0 %v208
    %248 = vmatpush.msra.mxu0 %v207
    %249 = vmatpush.msra.mxu0 %v206
    %250 = vmatpush.msra.mxu0 %v205
    %251 = vmatpush.msra.mxu0 %v204
    %252 = vmatpush.msra.mxu0 %v203
    %253 = vmatpush.msra.mxu0 %v202
    %254 = vmatmul.f32.gmra.mxu0 %v170
    %v255 = vpop.f32.mrf.mxu0
    %v256 = vadd.f32 %v236, %v255
    %257 = vmatmul.f32.gmra.mxu0 %v171
    %v258 = vpop.f32.mrf.mxu0
    %v259 = vadd.f32 %v236, %v258
    %260 = vdwg.mxu0
    %261 = vmatpush.msra.mxu0 %v233
    %262 = vmatpush.msra.mxu0 %v232
    %263 = vmatpush.msra.mxu0 %v231
    %264 = vmatpush.msra.mxu0 %v230
    %265 = vmatpush.msra.mxu0 %v229
    %266 = vmatpush.msra.mxu0 %v228
    %267 = vmatpush.msra.mxu0 %v227
    %268 = vmatpush.msra.mxu0 %v226
    %269 = vmatpush.msra.mxu0 %v225
    %270 = vmatpush.msra.mxu0 %v224
    %271 = vmatpush.msra.mxu0 %v223
    %272 = vmatpush.msra.mxu0 %v222
    %273 = vmatpush.msra.mxu0 %v221
    %274 = vmatpush.msra.mxu0 %v220
    %275 = vmatpush.msra.mxu0 %v219
    %276 = vmatpush.msra.mxu0 %v218
    %277 = vmatmul.f32.gmra.mxu0 %v197
    %v278 = vpop.f32.mrf.mxu0
    %v279 = vadd.f32 %v256, %v278
    %280 = vmatmul.f32.gmra.mxu0 %v200
    %v281 = vpop.f32.mrf.mxu0
    %v282 = vadd.f32 %v259, %v281
    %283 = vdwg.mxu0
    %284 = vmatpush.msra.mxu0 0.0
    %285 = vmatpush.msra.mxu0 0.0
    %286 = vmatpush.msra.mxu0 0.0
    %287 = vmatpush.msra.mxu0 0.0
    %288 = vmatpush.msra.mxu0 0.0
    %289 = vmatpush.msra.mxu0 0.0
    %290 = vmatpush.msra.mxu0 0.0
    %291 = vmatpush.msra.mxu0 0.0
    %292 = vmatpush.msra.mxu0 0.0
    %293 = vmatpush.msra.mxu0 0.0
    %294 = vmatpush.msra.mxu0 0.0
    %295 = vmatpush.msra.mxu0 0.0
    %296 = vmatpush.msra.mxu0 0.0
    %297 = vmatpush.msra.mxu0 0.0
    %298 = vmatpush.msra.mxu0 %v282
    %299 = vmatpush.msra.mxu0 %v279
    %300 = vmatmul.f32.gmra.mxu0 %v174
    %v301 = vpop.f32.mrf.mxu0
    %v302 = vadd.f32 0.0, %v301
    %303 = vmatmul.f32.gmra.mxu0 %v177
    %v304 = vpop.f32.mrf.mxu0
    %v305 = vadd.f32 0.0, %v304
    %306 = vdwg.mxu0
    %v307 = vld [vmem:[#allocation10] sm:$0xff]
    %v308 = vld [vmem:[#allocation10 + $0x8] sm:$0xff]
    %v309 = vld [vmem:[#allocation10 + $0x10] sm:$0xff]
    %v310 = vld [vmem:[#allocation10 + $0x18] sm:$0xff]
    %v311 = vld [vmem:[#allocation10 + $0x20] sm:$0xff]
    %v312 = vld [vmem:[#allocation10 + $0x28] sm:$0xff]
    %v313 = vld [vmem:[#allocation10 + $0x30] sm:$0xff]
    %v314 = vld [vmem:[#allocation10 + $0x38] sm:$0xff]
    %v315 = vld [vmem:[#allocation10 + $0x40] sm:$0xff]
    %v316 = vld [vmem:[#allocation10 + $0x48] sm:$0xff]
    %v317 = vld [vmem:[#allocation10 + $0x50] sm:$0xff]
    %v318 = vld [vmem:[#allocation10 + $0x58] sm:$0xff]
    %v319 = vld [vmem:[#allocation10 + $0x60] sm:$0xff]
    %v320 = vld [vmem:[#allocation10 + $0x68] sm:$0xff]
    %v321 = vld [vmem:[#allocation10 + $0x70] sm:$0xff]
    %v322 = vld [vmem:[#allocation10 + $0x78] sm:$0xff]
    %v323 = vld [vmem:[#allocation10 + $0x80] sm:$0xff]
    %v324 = vld [vmem:[#allocation10 + $0x88] sm:$0xff]
    %v325 = vld [vmem:[#allocation10 + $0x90] sm:$0xff]
    %v326 = vld [vmem:[#allocation10 + $0x98] sm:$0xff]
    %v327 = vld [vmem:[#allocation10 + $0xa0] sm:$0xff]
    %v328 = vld [vmem:[#allocation10 + $0xa8] sm:$0xff]
    %v329 = vld [vmem:[#allocation10 + $0xb0] sm:$0xff]
    %v330 = vld [vmem:[#allocation10 + $0xb8] sm:$0xff]
    %v331 = vld [vmem:[#allocation10 + $0xc0] sm:$0xff]
    %v332 = vld [vmem:[#allocation10 + $0xc8] sm:$0xff]
    %v333 = vld [vmem:[#allocation10 + $0xd0] sm:$0xff]
    %v334 = vld [vmem:[#allocation10 + $0xd8] sm:$0xff]
    %v335 = vld [vmem:[#allocation10 + $0xe0] sm:$0xff]
    %v336 = vld [vmem:[#allocation10 + $0xe8] sm:$0xff]
    %v337 = vld [vmem:[#allocation10 + $0xf0] sm:$0xff]
    %v338 = vld [vmem:[#allocation10 + $0xf8] sm:$0xff]
    %v339 = vld [vmem:[%s6] sm:$0x1]
    %v341 = vperm.slane %v339, 0
    %343 = vmatpush.msra.mxu0 %v322
    %344 = vmatpush.msra.mxu0 %v321
    %345 = vmatpush.msra.mxu0 %v320
    %346 = vmatpush.msra.mxu0 %v319
    %347 = vmatpush.msra.mxu0 %v318
    %348 = vmatpush.msra.mxu0 %v317
    %349 = vmatpush.msra.mxu0 %v316
    %350 = vmatpush.msra.mxu0 %v315
    %351 = vmatpush.msra.mxu0 %v314
    %352 = vmatpush.msra.mxu0 %v313
    %353 = vmatpush.msra.mxu0 %v312
    %354 = vmatpush.msra.mxu0 %v311
    %355 = vmatpush.msra.mxu0 %v310
    %356 = vmatpush.msra.mxu0 %v309
    %357 = vmatpush.msra.mxu0 %v308
    %358 = vmatpush.msra.mxu0 %v307
    %359 = vmatmul.f32.gmra.mxu0 %v279
    %v360 = vpop.f32.mrf.mxu0
    %v361 = vadd.f32 %v341, %v360
    %362 = vmatmul.f32.gmra.mxu0 %v282
    %v363 = vpop.f32.mrf.mxu0
    %v364 = vadd.f32 %v341, %v363
    %365 = vdwg.mxu0
    %366 = vmatpush.msra.mxu0 %v338
    %367 = vmatpush.msra.mxu0 %v337
    %368 = vmatpush.msra.mxu0 %v336
    %369 = vmatpush.msra.mxu0 %v335
    %370 = vmatpush.msra.mxu0 %v334
    %371 = vmatpush.msra.mxu0 %v333
    %372 = vmatpush.msra.mxu0 %v332
    %373 = vmatpush.msra.mxu0 %v331
    %374 = vmatpush.msra.mxu0 %v330
    %375 = vmatpush.msra.mxu0 %v329
    %376 = vmatpush.msra.mxu0 %v328
    %377 = vmatpush.msra.mxu0 %v327
    %378 = vmatpush.msra.mxu0 %v326
    %379 = vmatpush.msra.mxu0 %v325
    %380 = vmatpush.msra.mxu0 %v324
    %381 = vmatpush.msra.mxu0 %v323
    %382 = vmatmul.f32.gmra.mxu0 %v302
    %v383 = vpop.f32.mrf.mxu0
    %v384 = vadd.f32 %v361, %v383
    %385 = vmatmul.f32.gmra.mxu0 %v305
    %v386 = vpop.f32.mrf.mxu0
    %v387 = vadd.f32 %v364, %v386
    %388 = vdwg.mxu0
    %389 = vmatpush.msra.mxu0 0.0
    %390 = vmatpush.msra.mxu0 0.0
    %391 = vmatpush.msra.mxu0 0.0
    %392 = vmatpush.msra.mxu0 0.0
    %393 = vmatpush.msra.mxu0 0.0
    %394 = vmatpush.msra.mxu0 0.0
    %395 = vmatpush.msra.mxu0 0.0
    %396 = vmatpush.msra.mxu0 0.0
    %397 = vmatpush.msra.mxu0 0.0
    %398 = vmatpush.msra.mxu0 0.0
    %399 = vmatpush.msra.mxu0 0.0
    %400 = vmatpush.msra.mxu0 0.0
    %401 = vmatpush.msra.mxu0 0.0
    %402 = vmatpush.msra.mxu0 0.0
    %403 = vmatpush.msra.mxu0 %v387
    %404 = vmatpush.msra.mxu0 %v384
    %405 = vmatmul.f32.gmra.mxu0 %v174
    %v406 = vpop.f32.mrf.mxu0
    %v407 = vadd.f32 0.0, %v406
    %408 = vmatmul.f32.gmra.mxu0 %v177
    %v409 = vpop.f32.mrf.mxu0
    %v410 = vadd.f32 0.0, %v409
    %411 = vdwg.mxu0
    %v412 = vld [vmem:[#allocation11] sm:$0xff]
    %v413 = vld [vmem:[#allocation11 + $0x8] sm:$0xff]
    %v414 = vld [vmem:[#allocation11 + $0x10] sm:$0xff]
    %v415 = vld [vmem:[#allocation11 + $0x18] sm:$0xff]
    %v416 = vld [vmem:[#allocation11 + $0x20] sm:$0xff]
    %v417 = vld [vmem:[#allocation11 + $0x28] sm:$0xff]
    %v418 = vld [vmem:[#allocation11 + $0x30] sm:$0xff]
    %v419 = vld [vmem:[#allocation11 + $0x38] sm:$0xff]
    %v420 = vld [vmem:[#allocation11 + $0x40] sm:$0xff]
    %v421 = vld [vmem:[#allocation11 + $0x48] sm:$0xff]
    %v422 = vld [vmem:[#allocation11 + $0x50] sm:$0xff]
    %v423 = vld [vmem:[#allocation11 + $0x58] sm:$0xff]
    %v424 = vld [vmem:[#allocation11 + $0x60] sm:$0xff]
    %v425 = vld [vmem:[#allocation11 + $0x68] sm:$0xff]
    %v426 = vld [vmem:[#allocation11 + $0x70] sm:$0xff]
    %v427 = vld [vmem:[#allocation11 + $0x78] sm:$0xff]
    %v428 = vld [vmem:[#allocation11 + $0x80] sm:$0xff]
    %v429 = vld [vmem:[#allocation11 + $0x88] sm:$0xff]
    %v430 = vld [vmem:[#allocation11 + $0x90] sm:$0xff]
    %v431 = vld [vmem:[#allocation11 + $0x98] sm:$0xff]
    %v432 = vld [vmem:[#allocation11 + $0xa0] sm:$0xff]
    %v433 = vld [vmem:[#allocation11 + $0xa8] sm:$0xff]
    %v434 = vld [vmem:[#allocation11 + $0xb0] sm:$0xff]
    %v435 = vld [vmem:[#allocation11 + $0xb8] sm:$0xff]
    %v436 = vld [vmem:[#allocation11 + $0xc0] sm:$0xff]
    %v437 = vld [vmem:[#allocation11 + $0xc8] sm:$0xff]
    %v438 = vld [vmem:[#allocation11 + $0xd0] sm:$0xff]
    %v439 = vld [vmem:[#allocation11 + $0xd8] sm:$0xff]
    %v440 = vld [vmem:[#allocation11 + $0xe0] sm:$0xff]
    %v441 = vld [vmem:[#allocation11 + $0xe8] sm:$0xff]
    %v442 = vld [vmem:[#allocation11 + $0xf0] sm:$0xff]
    %v443 = vld [vmem:[#allocation11 + $0xf8] sm:$0xff]
    %v444 = vld [vmem:[%s8] sm:$0x1]
    %v446 = vperm.slane %v444, 0
    %448 = vmatpush.msra.mxu0 %v427
    %449 = vmatpush.msra.mxu0 %v426
    %450 = vmatpush.msra.mxu0 %v425
    %451 = vmatpush.msra.mxu0 %v424
    %452 = vmatpush.msra.mxu0 %v423
    %453 = vmatpush.msra.mxu0 %v422
    %454 = vmatpush.msra.mxu0 %v421
    %455 = vmatpush.msra.mxu0 %v420
    %456 = vmatpush.msra.mxu0 %v419
    %457 = vmatpush.msra.mxu0 %v418
    %458 = vmatpush.msra.mxu0 %v417
    %459 = vmatpush.msra.mxu0 %v416
    %460 = vmatpush.msra.mxu0 %v415
    %461 = vmatpush.msra.mxu0 %v414
    %462 = vmatpush.msra.mxu0 %v413
    %463 = vmatpush.msra.mxu0 %v412
    %464 = vmatmul.f32.gmra.mxu0 %v384
    %v465 = vpop.f32.mrf.mxu0
    %v466 = vadd.f32 %v446, %v465
    %467 = vmatmul.f32.gmra.mxu0 %v387
    %v468 = vpop.f32.mrf.mxu0
    %v469 = vadd.f32 %v446, %v468
    %470 = vdwg.mxu0
    %471 = vmatpush.msra.mxu0 %v443
    %472 = vmatpush.msra.mxu0 %v442
    %473 = vmatpush.msra.mxu0 %v441
    %474 = vmatpush.msra.mxu0 %v440
    %475 = vmatpush.msra.mxu0 %v439
    %476 = vmatpush.msra.mxu0 %v438
    %477 = vmatpush.msra.mxu0 %v437
    %478 = vmatpush.msra.mxu0 %v436
    %479 = vmatpush.msra.mxu0 %v435
    %480 = vmatpush.msra.mxu0 %v434
    %481 = vmatpush.msra.mxu0 %v433
    %482 = vmatpush.msra.mxu0 %v432
    %483 = vmatpush.msra.mxu0 %v431
    %484 = vmatpush.msra.mxu0 %v430
    %485 = vmatpush.msra.mxu0 %v429
    %486 = vmatpush.msra.mxu0 %v428
    %487 = vmatmul.f32.gmra.mxu0 %v407
    %v488 = vpop.f32.mrf.mxu0
    %v489 = vadd.f32 %v466, %v488
    %490 = vmatmul.f32.gmra.mxu0 %v410
    %v491 = vpop.f32.mrf.mxu0
    %v492 = vadd.f32 %v469, %v491
    %493 = vdwg.mxu0
    %v494 = vld [vmem:[#allocation13] sm:$0xff]
    %v495 = vld [vmem:[#allocation13 + $0x8] sm:$0xff]
    %v496 = vld [vmem:[#allocation13 + $0x10] sm:$0xff]
    %v497 = vld [vmem:[#allocation13 + $0x18] sm:$0xff]
    %v498 = vld [vmem:[#allocation13 + $0x20] sm:$0xff]
    %v499 = vld [vmem:[#allocation13 + $0x28] sm:$0xff]
    %v500 = vld [vmem:[#allocation13 + $0x30] sm:$0xff]
    %v501 = vld [vmem:[#allocation13 + $0x38] sm:$0xff]
    %v502 = vld [vmem:[#allocation13 + $0x40] sm:$0xff]
    %v503 = vld [vmem:[#allocation13 + $0x48] sm:$0xff]
    %v504 = vld [vmem:[#allocation13 + $0x50] sm:$0xff]
    %v505 = vld [vmem:[#allocation13 + $0x58] sm:$0xff]
    %v506 = vld [vmem:[#allocation13 + $0x60] sm:$0xff]
    %v507 = vld [vmem:[#allocation13 + $0x68] sm:$0xff]
    %v508 = vld [vmem:[#allocation13 + $0x70] sm:$0xff]
    %v509 = vld [vmem:[#allocation13 + $0x78] sm:$0xff]
    %v510 = vld [vmem:[%s10] sm:$0x1]
    %v512 = vperm.slane %v510, 0
    %514 = vmatpush.msra.mxu0 %v509
    %515 = vmatpush.msra.mxu0 %v508
    %516 = vmatpush.msra.mxu0 %v507
    %517 = vmatpush.msra.mxu0 %v506
    %518 = vmatpush.msra.mxu0 %v505
    %519 = vmatpush.msra.mxu0 %v504
    %520 = vmatpush.msra.mxu0 %v503
    %521 = vmatpush.msra.mxu0 %v502
    %522 = vmatpush.msra.mxu0 %v501
    %523 = vmatpush.msra.mxu0 %v500
    %524 = vmatpush.msra.mxu0 %v499
    %525 = vmatpush.msra.mxu0 %v498
    %526 = vmatpush.msra.mxu0 %v497
    %527 = vmatpush.msra.mxu0 %v496
    %528 = vmatpush.msra.mxu0 %v495
    %529 = vmatpush.msra.mxu0 %v494
    %530 = vmatmul.f32.gmra.mxu0 %v489
    %v531 = vpop.f32.mrf.mxu0
    %v532 = vadd.f32 %v512, %v531
    %533 = vmatmul.f32.gmra.mxu0 %v492
    %v534 = vpop.f32.mrf.mxu0
    %v535 = vadd.f32 %v512, %v534
    %536 = vdwg.mxu0
    %v537 = vmax.f32 %v532, 0.0
    %v538 = vmax.f32 %v535, 0.0
    %v539 = vld [vmem:[#allocation14] sm:$0xff]
    %v540 = vld [vmem:[#allocation14 + $0x8] sm:$0xff]
    %v541 = vld [vmem:[#allocation14 + $0x10] sm:$0xff]
    %v542 = vld [vmem:[#allocation14 + $0x18] sm:$0xff]
    %v543 = vld [vmem:[#allocation14 + $0x20] sm:$0xff]
    %v544 = vld [vmem:[#allocation14 + $0x28] sm:$0xff]
    %v545 = vld [vmem:[#allocation14 + $0x30] sm:$0xff]
    %v546 = vld [vmem:[#allocation14 + $0x38] sm:$0xff]
    %v547 = vld [vmem:[#allocation14 + $0x40] sm:$0xff]
    %v548 = vld [vmem:[#allocation14 + $0x48] sm:$0xff]
    %v549 = vld [vmem:[#allocation14 + $0x50] sm:$0xff]
    %v550 = vld [vmem:[#allocation14 + $0x58] sm:$0xff]
    %v551 = vld [vmem:[#allocation14 + $0x60] sm:$0xff]
    %v552 = vld [vmem:[#allocation14 + $0x68] sm:$0xff]
    %v553 = vld [vmem:[#allocation14 + $0x70] sm:$0xff]
    %v554 = vld [vmem:[#allocation14 + $0x78] sm:$0xff]
    %v555 = vld [vmem:[%s12] sm:$0x1]
    %v557 = vperm.slane %v555, 0
    %559 = vmatpush.msra.mxu0 %v554
    %560 = vmatpush.msra.mxu0 %v553
    %561 = vmatpush.msra.mxu0 %v552
    %562 = vmatpush.msra.mxu0 %v551
    %563 = vmatpush.msra.mxu0 %v550
    %564 = vmatpush.msra.mxu0 %v549
    %565 = vmatpush.msra.mxu0 %v548
    %566 = vmatpush.msra.mxu0 %v547
    %567 = vmatpush.msra.mxu0 %v546
    %568 = vmatpush.msra.mxu0 %v545
    %569 = vmatpush.msra.mxu0 %v544
    %570 = vmatpush.msra.mxu0 %v543
    %571 = vmatpush.msra.mxu0 %v542
    %572 = vmatpush.msra.mxu0 %v541
    %573 = vmatpush.msra.mxu0 %v540
    %574 = vmatpush.msra.mxu0 %v539
    %575 = vmatmul.f32.gmra.mxu0 %v537
    %v576 = vpop.f32.mrf.mxu0
    %v577 = vadd.f32 %v557, %v576
    %578 = vmatmul.f32.gmra.mxu0 %v538
    %v579 = vpop.f32.mrf.mxu0
    %v580 = vadd.f32 %v557, %v579
    %581 = vdwg.mxu0
    %v582 = vld [vmem:[#allocation7] sm:$0xff]
    %v584 = vsel %vm172, %v582, 0
    %586 = vmatpush.msra.mxu0 0.0
    %587 = vmatpush.msra.mxu0 0.0
    %588 = vmatpush.msra.mxu0 0.0
    %589 = vmatpush.msra.mxu0 0.0
    %590 = vmatpush.msra.mxu0 0.0
    %591 = vmatpush.msra.mxu0 0.0
    %592 = vmatpush.msra.mxu0 0.0
    %593 = vmatpush.msra.mxu0 0.0
    %594 = vmatpush.msra.mxu0 0.0
    %595 = vmatpush.msra.mxu0 0.0
    %596 = vmatpush.msra.mxu0 0.0
    %597 = vmatpush.msra.mxu0 0.0
    %598 = vmatpush.msra.mxu0 0.0
    %599 = vmatpush.msra.mxu0 0.0
    %600 = vmatpush.msra.mxu0 %v580
    %601 = vmatpush.msra.mxu0 %v577
    %602 = vmatmul.f32.gmra.mxu0 %v584
    %v603 = vpop.f32.mrf.mxu0
    %v604 = vadd.f32 0.0, %v603
    %605 = vdwg.mxu0
    %606 = vst [vmem:[#allocation16] sm:$0xff] %v604
    // Predicated region
    $region86: #{tpu_custom_call.1} parent=1 // pred_check
      _
    $region87: #{tpu_custom_call.1} parent=1 // pred_check_branch
      %608 = sbr.rel (0) target = $region89
    $region88: #{tpu_custom_call.1} parent=1 // pred_region
      %610 = vsyncadd [#allocation4], 0
      %s612 = sshll.u32 [#allocation16], 4
      %s613 = int_to_ptr.vmem [resolvable:$true] %s612
      %s614 = sshll.u32 %s13, 4
      %s615 = int_to_ptr.hbm [resolvable:$true] %s614
      %617 = dma.vmem_to_hbm [thread:$0]  %s613, 128, %s615, [#allocation4]
    $region89: #{tpu_custom_call.1} parent=1 // pred_fallthru
      _
    // Predicated region
    $region90: #{tpu_custom_call.1} parent=1 // pred_check
      _
    $region91: #{tpu_custom_call.1} parent=1 // pred_check_branch
      %619 = sbr.rel (0) target = $region93
    $region92: #{tpu_custom_call.1} parent=1 // pred_region
      %621 = dma.done [#allocation4], 128
    $region93: #{tpu_custom_call.1} parent=1 // pred_fallthru
      _
    %622 = vsyncpa [#allocation3], 1
    %623 = vsyncpa [#allocation6], 1
    %624 = vsyncpa [#allocation9], 1
    %625 = vsyncpa [#allocation12], 1
    %626 = vsyncpa [#allocation15], 1
    %627 = vsyncpa [#allocation4], 1

</llo_original>
